<compile_context>
chip_gen: v6e
topology: v6e:2x2x1
jax: 0.10.0
libtpu: 0.0.40
codegen_flags: <defaults>
</compile_context>

<pallas_src>
import functools

import jax
import jax.numpy as jnp
from jax.experimental import pallas as pl
from jax.experimental.pallas import tpu as pltpu


# ----------------------------- Pallas kernels ------------------------------


def _conv1x1_kernel(w_ref, b_ref, x_ref, o_ref):
    # w: (c_out, c_in), x: (c_in, tm), b: (c_out, 1) -> o: (c_out, tm)
    acc = jnp.dot(
        w_ref[...],
        x_ref[...],
        preferred_element_type=jnp.float32,
        precision=jax.lax.Precision.HIGHEST,
    )
    o_ref[...] = (acc + b_ref[...]).astype(o_ref.dtype)


def _pad_kernel(c_in, x_ref, o_ref):
    # x: (c_in, tm) -> o: (c_out, tm); build the full tile in vregs and issue a
    # single unmasked store (avoids masked partial-sublane stores when
    # c_in % 8 != 0 — matters most on v5e's single vst slot).
    c_out, tm = o_ref.shape
    zeros = jnp.zeros((c_out - c_in, tm), o_ref.dtype)
    o_ref[...] = jnp.concatenate([x_ref[...], zeros], axis=0)


# ------------------------------ tiling helper -------------------------------


def _round_up(x, m):
    return ((x + m - 1) // m) * m


def _choose_tm(n, tv, cap=2048, min_steps=8):
    """Lane-tile width along the flattened T*V axis.

    Always a multiple of 128 (lane-dense stores); at most `cap`; chosen so the
    total grid N * cdiv(TV, tm) has ~min_steps iterations when possible (DMA
    pipelining depth + both v7x TensorCores fed). The ragged tail block (when
    tm does not divide TV) is masked by Pallas.
    """
    n = max(int(n), 1)
    tv = max(int(tv), 1)
    # Tile count implied by the cap, then raise it until the grid has enough
    # total steps; never go finer than 128-wide tiles.
    tiles = max(pl.cdiv(tv, cap), pl.cdiv(min_steps, n))
    tiles = min(tiles, pl.cdiv(tv, 128))
    tiles = max(tiles, 1)
    # Balanced width so the tail block is not mostly padding.
    tm = _round_up(pl.cdiv(tv, tiles), 128)
    return min(max(tm, 128), max(cap, 128))


# ------------------------------ JAX wrappers --------------------------------


def _conv1x1(w, b, x_nctv, tm):
    """w: (c_out, c_in), b: (c_out, 1), x: (N, c_in, TV) -> (N, c_out, TV)."""
    c_out, c_in = w.shape
    n, _, tv = x_nctv.shape
    grid = (n, pl.cdiv(tv, tm))
    itemsize = jnp.dtype(x_nctv.dtype).itemsize
    cost = pl.CostEstimate(
        flops=2 * n * c_out * c_in * tv,
        transcendentals=0,
        bytes_accessed=itemsize * (n * (c_in + c_out) * tv + c_out * c_in + c_out),
    )
    return pl.pallas_call(
        _conv1x1_kernel,
        out_shape=jax.ShapeDtypeStruct((n, c_out, tv), x_nctv.dtype),
        grid_spec=pltpu.PrefetchScalarGridSpec(
            num_scalar_prefetch=0,
            grid=grid,
            in_specs=[
                pl.BlockSpec((c_out, c_in), lambda i, j: (0, 0)),
                pl.BlockSpec((c_out, 1), lambda i, j: (0, 0)),
                pl.BlockSpec((pl.Squeezed(), c_in, tm), lambda i, j: (i, 0, j)),
            ],
            out_specs=pl.BlockSpec(
                (pl.Squeezed(), c_out, tm), lambda i, j: (i, 0, j)
            ),
        ),
        compiler_params=pltpu.CompilerParams(
            dimension_semantics=("parallel", "parallel")
        ),
        cost_estimate=cost,
    )(w, b, x_nctv)


def _pad_channels(x_nctv, c_out, tm):
    """x: (N, c_in, TV) -> (N, c_out, TV) with trailing channels zero."""
    n, c_in, tv = x_nctv.shape
    grid = (n, pl.cdiv(tv, tm))
    itemsize = jnp.dtype(x_nctv.dtype).itemsize
    cost = pl.CostEstimate(
        flops=0,
        transcendentals=0,
        bytes_accessed=itemsize * n * (c_in + c_out) * tv,
    )
    return pl.pallas_call(
        functools.partial(_pad_kernel, c_in),
        out_shape=jax.ShapeDtypeStruct((n, c_out, tv), x_nctv.dtype),
        grid_spec=pltpu.PrefetchScalarGridSpec(
            num_scalar_prefetch=0,
            grid=grid,
            in_specs=[
                pl.BlockSpec((pl.Squeezed(), c_in, tm), lambda i, j: (i, 0, j))
            ],
            out_specs=pl.BlockSpec(
                (pl.Squeezed(), c_out, tm), lambda i, j: (i, 0, j)
            ),
        ),
        compiler_params=pltpu.CompilerParams(
            dimension_semantics=("parallel", "parallel")
        ),
        cost_estimate=cost,
    )(x_nctv)


def align_forward(x, c_in, c_out, w=None, b=None, *, tm_cap=2048):
    """Align.forward. x: (N, C, T, V) with C == c_in.

    w: (c_out, c_in, 1, 1) conv weight, b: (c_out,) conv bias (only for c_in > c_out).
    """
    N, C, T, V = x.shape
    assert C == c_in
    if c_in == c_out:
        return x

    tv = T * V
    tm = _choose_tm(N, tv, cap=tm_cap)
    x3 = x.reshape(N, c_in, tv)  # contiguous reshape: no extra HBM traffic

    if c_in > c_out:
        w2 = w.reshape(c_out, c_in)  # 1x1 conv == channel matmul
        b2 = b.reshape(c_out, 1)
        out3 = _conv1x1(w2, b2, x3, tm)
    else:  # c_in < c_out : zero-pad channels
        out3 = _pad_channels(x3, c_out, tm)

    return out3.reshape(N, c_out, T, V)


# --------------------------------- main --------------------------------------


if __name__ == "__main__":
    key = jax.random.PRNGKey(0)
    k_x1, k_x2, k_x3, k_w1, k_b1, k_w3, k_b3 = jax.random.split(key, 7)

    HIGH = jax.lax.Precision.HIGHEST

    # ---- Case 1: c_in > c_out -> 1x1 conv path (small shapes, 128-aligned T*V) ----
    N, c_in, T, V = 2, 8, 16, 16
    c_out = 4
    x1 = jax.random.normal(k_x1, (N, c_in, T, V), dtype=jnp.float32)
    bound = 1.0 / (c_in ** 0.5)
    w1 = jax.random.uniform(k_w1, (c_out, c_in, 1, 1), jnp.float32, -bound, bound)
    b1 = jax.random.uniform(k_b1, (c_out,), jnp.float32, -bound, bound)

    y1 = jax.block_until_ready(align_forward(x1, c_in, c_out, w1, b1))
    ref1 = (
        jnp.einsum("oc,nctv->notv", w1.reshape(c_out, c_in), x1, precision=HIGH)
        + b1[None, :, None, None]
    )
    assert y1.shape == (N, c_out, T, V)
    assert jnp.allclose(y1, ref1, atol=1e-5, rtol=1e-5)

    # ---- Case 1b: production-ish channels + non-128-aligned T*V (V=25 joints) ----
    # Exercises the ragged-tail tiling (tm=128 multiple, masked last block).
    N3, c_in3, c_out3, T3, V3 = 2, 64, 32, 12, 25
    x3 = jax.random.normal(k_x3, (N3, c_in3, T3, V3), dtype=jnp.float32)
    bound3 = 1.0 / (c_in3 ** 0.5)
    w3 = jax.random.uniform(k_w3, (c_out3, c_in3, 1, 1), jnp.float32, -bound3, bound3)
    b3 = jax.random.uniform(k_b3, (c_out3,), jnp.float32, -bound3, bound3)

    y1b = jax.block_until_ready(align_forward(x3, c_in3, c_out3, w3, b3))
    ref1b = (
        jnp.einsum("oc,nctv->notv", w3.reshape(c_out3, c_in3), x3, precision=HIGH)
        + b3[None, :, None, None]
    )
    assert y1b.shape == (N3, c_out3, T3, V3)
    assert jnp.allclose(y1b, ref1b, atol=1e-4, rtol=1e-4)

    # ---- Case 2: c_in < c_out -> zero-pad channels (c_in % 8 != 0 path) ----
    c_in2, c_out2 = 4, 8
    x2 = jax.random.normal(k_x2, (N, c_in2, T, V), dtype=jnp.float32)
    y2 = jax.block_until_ready(align_forward(x2, c_in2, c_out2))
    ref2 = jnp.concatenate(
        [x2, jnp.zeros((N, c_out2 - c_in2, T, V), x2.dtype)], axis=1
    )
    assert y2.shape == (N, c_out2, T, V)
    assert jnp.allclose(y2, ref2)

    # ---- Case 3: c_in == c_out -> identity ----
    y3 = jax.block_until_ready(align_forward(x2, c_in2, c_in2))
    assert jnp.array_equal(y3, x2)

    print("KERNEL_OK")
</pallas_src>

<mosaic_0001>
module attributes {stable_mosaic.version = 11 : i64} {
  func.func @_conv1x1_kernel(%arg0: i32, %arg1: i32, %arg2: memref<4x8xf32, #tpu.memory_space<vmem>>, %arg3: memref<4x1xf32, #tpu.memory_space<vmem>>, %arg4: memref<1x8x128xf32, #tpu.memory_space<vmem>>, %arg5: memref<1x4x128xf32, #tpu.memory_space<vmem>>) attributes {dimension_semantics = [#tpu.dimension_semantics<parallel>, #tpu.dimension_semantics<parallel>], iteration_bounds = array<i64: 2, 2>, scalar_prefetch = 0 : i64, scratch_operands = 0 : i64, tpu.core_type = #tpu.core_type<tc>, window_params = [{pipeline_mode = #tpu.pipeline_mode<synchronous>, transform_indices = @transform_0, window_bounds = array<i64: 4, 8>}, {pipeline_mode = #tpu.pipeline_mode<synchronous>, transform_indices = @transform_1, window_bounds = array<i64: 4, 1>}, {transform_indices = @transform_2, window_bounds = array<i64: 1, 8, 128>}, {transform_indices = @transform_3, window_bounds = array<i64: 1, 4, 128>}]} {
    %c0 = arith.constant 0 : index
    %c0_0 = arith.constant 0 : index
    %0 = vector.load %arg2[%c0, %c0_0] : memref<4x8xf32, #tpu.memory_space<vmem>>, vector<4x8xf32>
    %c0_1 = arith.constant 0 : index
    %c0_2 = arith.constant 0 : index
    %c0_3 = arith.constant 0 : index
    %1 = vector.load %arg4[%c0_1, %c0_2, %c0_3] : memref<1x8x128xf32, #tpu.memory_space<vmem>>, vector<1x8x128xf32>
    %2 = vector.shape_cast %1 : vector<1x8x128xf32> to vector<8x128xf32>
    %cst = arith.constant dense<0.000000e+00> : vector<4x128xf32>
    %3 = tpu.matmul %0, %2, %cst {dimension_numbers = #tpu.dot_dimension_numbers<[1], [0], [0], [1], [0, 0, 1, 1], [], []>, precision = #tpu.contract_precision<fp32>} : vector<4x8xf32>, vector<8x128xf32>, vector<4x128xf32> -> vector<4x128xf32>
    %c0_4 = arith.constant 0 : index
    %c0_5 = arith.constant 0 : index
    %4 = vector.load %arg3[%c0_4, %c0_5] : memref<4x1xf32, #tpu.memory_space<vmem>>, vector<4x1xf32>
    %5 = vector.broadcast %4 : vector<4x1xf32> to vector<4x128xf32>
    %6 = arith.addf %3, %5 : vector<4x128xf32>
    %c0_6 = arith.constant 0 : index
    %c0_7 = arith.constant 0 : index
    %c0_8 = arith.constant 0 : index
    %7 = vector.load %arg5[%c0_6, %c0_7, %c0_8] : memref<1x4x128xf32, #tpu.memory_space<vmem>>, vector<1x4x128xf32>
    %8 = vector.shape_cast %7 : vector<1x4x128xf32> to vector<4x128xf32>
    %9 = vector.shape_cast %6 : vector<4x128xf32> to vector<1x4x128xf32>
    tpu.vector_store %arg5[%c0_6, %c0_7, %c0_8], %9 {strides = array<i32>} : memref<1x4x128xf32, #tpu.memory_space<vmem>>, vector<1x4x128xf32>,
    return
  }
  func.func @transform_0(%arg0: i32, %arg1: i32) -> (i32, i32) {
    %c0_i32 = arith.constant 0 : i32
    %c0_i32_0 = arith.constant 0 : i32
    %c0_i32_1 = arith.constant 0 : i32
    return %c0_i32, %c0_i32_0 : i32, i32
  }
  func.func @transform_1(%arg0: i32, %arg1: i32) -> (i32, i32) {
    %c0_i32 = arith.constant 0 : i32
    %c0_i32_0 = arith.constant 0 : i32
    %c0_i32_1 = arith.constant 0 : i32
    return %c0_i32, %c0_i32_0 : i32, i32
  }
  func.func @transform_2(%arg0: i32, %arg1: i32) -> (i32, i32, i32) {
    %c0_i32 = arith.constant 0 : i32
    %c0_i32_0 = arith.constant 0 : i32
    return %arg0, %c0_i32, %arg1 : i32, i32, i32
  }
  func.func @transform_3(%arg0: i32, %arg1: i32) -> (i32, i32, i32) {
    %c0_i32 = arith.constant 0 : i32
    %c0_i32_0 = arith.constant 0 : i32
    return %arg0, %c0_i32, %arg1 : i32, i32, i32
  }
}

</mosaic_0001>

<llo_original>
// kernel: tpu_custom_call.1
$region0: #{tpu_custom_call.1}
  #allocation0 [shape = 'u32[]', space=smem, size = 0x4, offset = 0x4, fixed_abs, tag = 'smem constant byte address 0x4 - core index']
  #allocation1 [shape = 'u32[144,128]{1,0:T(1,128)}', space=vmem, size = 0x12000, scoped, tag = 'internal scratch']
  %s0 = inlined_call_operand.vmem [shape: f32[4,8], index: 0, kind: input, shape index: {}]
  %s1 = inlined_call_operand.vmem [shape: f32[4,1], index: 1, kind: input, shape index: {}]
  %s2 = inlined_call_operand.hbm [shape: f32[2,8,256], index: 2, kind: input, shape index: {}]
  %s3 = inlined_call_operand.hbm [shape: f32[2,4,256], index: 3, kind: output, shape index: {}]
  %s4 = sld [smem:[#allocation0]]
  $region49: #{tpu_custom_call.1} parent=0
    _
  %s6 = ssub.s32 1, %s4
  %s7 = scalar_select 0, %s6, %s4
  $region1: #{tpu_custom_call.1} parent=0
    #allocation2 [shape = 'u8[8192]{0}', space=vmem, size = 0x2000, scoped, tag = 'input window, operand 2']
    #allocation3 [shape = 's32[2]{0}', space=sflag, size = 0x8, scoped, tag = 'scoped memory for tpu_custom_call.1']
    #allocation4 [shape = 's32[2]{0}', space=sflag, size = 0x8, scoped, tag = 'scoped memory for tpu_custom_call.1']
    #allocation5 [shape = 'u8[4096]{0}', space=vmem, size = 0x1000, scoped, tag = 'output window, operand 0']
    %8 = vsyncpa [#allocation3], 0
    %s9 = scalar_lea.sflag [#allocation3], 1
    %10 = vsyncpa %s9, 0
    %11 = vsyncpa [#allocation4], 0
    %s12 = scalar_lea.sflag [#allocation4], 1
    %13 = vsyncpa %s12, 0
    loop: start=0, step=1, limit=6
    $region2: #{tpu_custom_call.1} parent=1 // loop_pre_header
      _
    $region3: #{tpu_custom_call.1} parent=1 // loop_header
      %s15 = sphi 0, %s19
      %p16 = scmp.ge.s32.totalorder %s15, 6
      %s22 = sphi 0, %s34
      %s23 = sphi 0, %s30
      %s24 = sphi 0, %s22
      %s25 = sphi 0, %s23
      %s26 = sphi 0, %s24
      %s27 = sphi 0, %s25
      %s35 = sphi 0, %s35
      %s37 = sphi 0, %s35
      %s38 = sphi 0, %s37
      %s52 = sphi 0, %s38
      %s56 = sphi 0, %s56
      %s58 = sphi 0, %s56
      %s59 = sphi 0, %s58
      %s73 = sphi 0, %s59
      %s81 = sphi 0, %s83
      %s84 = sphi 0, %s81
      %s85 = sphi 0, %s84
      %s101 = sphi 0, %s85
      %s109 = sphi 0, %s111
      %s112 = sphi 0, %s109
      %s113 = sphi 0, %s112
      %s129 = sphi 0, %s113
    $region4: #{tpu_custom_call.1} parent=1 // loop_header_branch
      %18 = sbr.rel (%p16) target = $region8
    $region5: #{tpu_custom_call.1} parent=1 // loop_body
      %s20 = ssub.s32 %s15, 1
      %s21 = ssub.s32 %s15, 2
      %s28 = sadd.s32 1, %s23
      %p29 = scmp.ge.s32.totalorder %s28, 2
      %s30 = scalar_select %p29, 0, %s28
      %s31 = sadd.s32 1, %s22
      %s32 = scalar_select %p29, %s31, %s22
      %p33 = scmp.ge.s32.totalorder %s32, 2
      %s34 = scalar_select %p33, 0, %s32
      %s36 = sadd.s32 %s35, 1
      %p39 = scmp.eq.s32.totalorder %s15, 3
      %p40 = scmp.ne.s32.totalorder %s35, %s37
      %p41 = scmp.eq.s32.totalorder %s15, 0
      %p42 = por %p40, %p41
      %p43 = scmp.ne.s32.totalorder %s35, %s37
      %p44 = scmp.eq.s32.totalorder %s20, 3
      %p45 = por %p43, %p44
      %p46 = scmp.ne.s32.totalorder %s37, %s38
      %p47 = scmp.eq.s32.totalorder %s20, 0
      %p48 = por %p46, %p47
      %p49 = scmp.ne.s32.totalorder %s37, %s38
      %p50 = scmp.eq.s32.totalorder %s21, 3
      %p51 = por %p49, %p50
      %p53 = scmp.ne.s32.totalorder %s38, %s52
      %p54 = scmp.eq.s32.totalorder %s21, 0
      %p55 = por %p53, %p54
      %s57 = sadd.s32 %s56, 1
      %p60 = scmp.eq.s32.totalorder %s15, 3
      %p61 = scmp.ne.s32.totalorder %s56, %s58
      %p62 = scmp.eq.s32.totalorder %s15, 0
      %p63 = por %p61, %p62
      %p64 = scmp.ne.s32.totalorder %s56, %s58
      %p65 = scmp.eq.s32.totalorder %s20, 3
      %p66 = por %p64, %p65
      %p67 = scmp.ne.s32.totalorder %s58, %s59
      %p68 = scmp.eq.s32.totalorder %s20, 0
      %p69 = por %p67, %p68
      %p70 = scmp.ne.s32.totalorder %s58, %s59
      %p71 = scmp.eq.s32.totalorder %s21, 3
      %p72 = por %p70, %p71
      %p74 = scmp.ne.s32.totalorder %s59, %s73
      %p75 = scmp.eq.s32.totalorder %s21, 0
      %p76 = por %p74, %p75
      %s77 = ssub.s32 %s22, %s34
      %s78 = ssub.s32 %s23, %s30
      %s79 = sor.u32 %s77, %s78
      %p80 = scmp.eq.s32.totalorder %s79, 0
      %s82 = sadd.s32 %s81, 1
      %s83 = scalar_select %p80, %s81, %s82
      %p86 = pneg %p80
      %p87 = scmp.eq.s32.totalorder %s15, 3
      %p88 = por %p86, %p87
      %p89 = scmp.ne.s32.totalorder %s81, %s84
      %p90 = scmp.eq.s32.totalorder %s15, 0
      %p91 = por %p89, %p90
      %p92 = scmp.ne.s32.totalorder %s81, %s84
      %p93 = scmp.eq.s32.totalorder %s20, 3
      %p94 = por %p92, %p93
      %p95 = scmp.ne.s32.totalorder %s84, %s85
      %p96 = scmp.eq.s32.totalorder %s20, 0
      %p97 = por %p95, %p96
      %p98 = scmp.ne.s32.totalorder %s84, %s85
      %p99 = scmp.eq.s32.totalorder %s21, 3
      %p100 = por %p98, %p99
      %p102 = scmp.ne.s32.totalorder %s85, %s101
      %p103 = scmp.eq.s32.totalorder %s21, 0
      %p104 = por %p102, %p103
      %s105 = ssub.s32 %s22, %s34
      %s106 = ssub.s32 %s23, %s30
      %s107 = sor.u32 %s105, %s106
      %p108 = scmp.eq.s32.totalorder %s107, 0
      %s110 = sadd.s32 %s109, 1
      %s111 = scalar_select %p108, %s109, %s110
      %p114 = pneg %p108
      %p115 = scmp.eq.s32.totalorder %s15, 3
      %p116 = por %p114, %p115
      %p117 = scmp.ne.s32.totalorder %s109, %s112
      %p118 = scmp.eq.s32.totalorder %s15, 0
      %p119 = por %p117, %p118
      %p120 = scmp.ne.s32.totalorder %s109, %s112
      %p121 = scmp.eq.s32.totalorder %s20, 3
      %p122 = por %p120, %p121
      %p123 = scmp.ne.s32.totalorder %s112, %s113
      %p124 = scmp.eq.s32.totalorder %s20, 0
      %p125 = por %p123, %p124
      %p126 = scmp.ne.s32.totalorder %s112, %s113
      %p127 = scmp.eq.s32.totalorder %s21, 3
      %p128 = por %p126, %p127
      %p130 = scmp.ne.s32.totalorder %s113, %s129
      %p131 = scmp.eq.s32.totalorder %s21, 0
      %p132 = por %p130, %p131
      %p133 = scmp.le.s32.totalorder 1, %s15
      %p134 = scmp.lt.s32.totalorder %s15, 5
      %p135 = pnand %p133, %p134
      %p136 = pneg %p135
      // Predicated region
      $region9: #{tpu_custom_call.1} parent=5 // pred_check
        _
      $region10: #{tpu_custom_call.1} parent=5 // pred_check_branch
        %138 = sbr.rel (%p135) target = $region12
      $region11: #{tpu_custom_call.1} parent=5 // pred_region
        %s139 = ssub.s32 %s15, 1
        // Predicated region
        $region13: #{tpu_custom_call.1} parent=11 // pred_check
          %p140 = pneg %p48
        $region14: #{tpu_custom_call.1} parent=11 // pred_check_branch
          %142 = sbr.rel (%p140) target = $region16
        $region15: #{tpu_custom_call.1} parent=11 // pred_region
          _
        $region16: #{tpu_custom_call.1} parent=11 // pred_fallthru
          _
        // Predicated region
        $region17: #{tpu_custom_call.1} parent=11 // pred_check
          %p143 = pneg %p69
        $region18: #{tpu_custom_call.1} parent=11 // pred_check_branch
          %145 = sbr.rel (%p143) target = $region20
        $region19: #{tpu_custom_call.1} parent=11 // pred_region
          _
        $region20: #{tpu_custom_call.1} parent=11 // pred_fallthru
          _
      $region12: #{tpu_custom_call.1} parent=5 // pred_fallthru
        _
      %p146 = scmp.lt.s32.totalorder %s15, 4
      // Predicated region
      $region21: #{tpu_custom_call.1} parent=5 // pred_check
        %p147 = pneg %p146
      $region22: #{tpu_custom_call.1} parent=5 // pred_check_branch
        %149 = sbr.rel (%p147) target = $region24
      $region23: #{tpu_custom_call.1} parent=5 // pred_region
        // Predicated region
        $region25: #{tpu_custom_call.1} parent=23 // pred_check
          %p150 = pneg %p91
        $region26: #{tpu_custom_call.1} parent=23 // pred_check_branch
          %152 = sbr.rel (%p150) target = $region28
        $region27: #{tpu_custom_call.1} parent=23 // pred_region
          %s153 = sand.u32 %s81, 1
          %s154 = scalar_lea.sflag [#allocation3], %s153
          %s155 = sand.u32 %s81, 1
          %s156 = smul.addr %s155, 8
          %s157 = scalar_lea.vmem [#allocation2], %s156
          %s159 = ssub.s32 128, 128
          %160 = vsyncadd %s154, %s159
          %s161 = smul.addr %s22, 2
          %s162 = sadd.s32 %s23, %s161
          %s163 = smul.addr %s162, 128
          %s164 = scalar_lea.hbm %s2, %s163
          %s166 = sshll.u32 %s157, 4
          %s167 = int_to_ptr.vmem [resolvable:$true] %s166
          %169 = dma.hbm_to_vmem [thread:$0]  %s164, 128, %s167, %s154
        $region28: #{tpu_custom_call.1} parent=23 // pred_fallthru
          _
      $region24: #{tpu_custom_call.1} parent=5 // pred_fallthru
        _
      %p170 = scmp.le.s32.totalorder 1, %s15
      %p171 = scmp.lt.s32.totalorder %s15, 5
      %p172 = pnand %p170, %p171
      %p173 = pneg %p172
      // Predicated region
      $region29: #{tpu_custom_call.1} parent=5 // pred_check
        _
      $region30: #{tpu_custom_call.1} parent=5 // pred_check_branch
        %175 = sbr.rel (%p172) target = $region32
      $region31: #{tpu_custom_call.1} parent=5 // pred_region
        %s176 = ssub.s32 %s15, 1
        %s177 = sand.u32 %s84, 1
        %s178 = scalar_lea.sflag [#allocation3], %s177
        %s179 = sand.u32 %s84, 1
        %s180 = smul.addr %s179, 8
        %s181 = scalar_lea.vmem [#allocation2], %s180
        // Predicated region
        $region33: #{tpu_custom_call.1} parent=31 // pred_check
          %p182 = pneg %p97
        $region34: #{tpu_custom_call.1} parent=31 // pred_check_branch
          %184 = sbr.rel (%p182) target = $region36
        $region35: #{tpu_custom_call.1} parent=31 // pred_region
          %185 = dma.done %s178, 128
        $region36: #{tpu_custom_call.1} parent=31 // pred_fallthru
          _
        %p186 = pneg %p48
        %p187 = pneg %p45
        %p188 = pneg %p69
        %p189 = pneg %p66
        %s190 = sand.u32 %s84, 1
        %s191 = scalar_lea.sflag [#allocation3], %s190
        %s192 = sand.u32 %s84, 1
        %s193 = smul.addr %s192, 8
        %s194 = scalar_lea.vmem [#allocation2], %s193
        %p195 = pneg %p97
        %p196 = pneg %p94
        %p197 = pneg %p125
        %p198 = pneg %p122
        %s199 = sand.u32 %s112, 1
        %s200 = scalar_lea.sflag [#allocation4], %s199
        %s201 = sand.u32 %s112, 1
        %s202 = smul.addr %s201, 4
        %s203 = scalar_lea.vmem [#allocation5], %s202
        %v204 = vld [vmem:[%s0] sm:$0xf]
        %v205 = vld [vmem:[%s181] sm:$0xff]
        %v206 = vld [vmem:[%s1] sm:$0xf]
        %208 = vset.pattern.permute.xlu0 0
        %209 = vperm.xlu0 %208, %v206
        %v210 = vpop.permute.xlu0 %209
        %vm212 = vcmask 64512
        %v214 = vsel %vm212, %v204, 0
        %216 = vmatprep.subr.mxu0 0.0
        %217 = vmatpush1.msra.mxu0 0.0
        %218 = vmatprep.subr.mxu0 0.0
        %219 = vmatpush1.msra.mxu0 0.0
        %220 = vmatprep.subr.mxu0 0.0
        %221 = vmatpush1.msra.mxu0 0.0
        %222 = vmatprep.subr.mxu0 0.0
        %223 = vmatpush1.msra.mxu0 0.0
        %224 = vmatprep.subr.mxu0 0.0
        %225 = vmatpush1.msra.mxu0 0.0
        %226 = vmatprep.subr.mxu0 0.0
        %227 = vmatpush1.msra.mxu0 0.0
        %228 = vmatprep.subr.mxu0 0.0
        %229 = vmatpush1.msra.mxu0 0.0
        %230 = vmatprep.subr.mxu0 0.0
        %231 = vmatpush1.msra.mxu0 0.0
        %232 = vmatprep.subr.mxu0 0.0
        %233 = vmatpush1.msra.mxu0 0.0
        %234 = vmatprep.subr.mxu0 0.0
        %235 = vmatpush1.msra.mxu0 0.0
        %236 = vmatprep.subr.mxu0 0.0
        %237 = vmatpush1.msra.mxu0 0.0
        %238 = vmatprep.subr.mxu0 0.0
        %239 = vmatpush1.msra.mxu0 0.0
        %240 = vmatprep.subr.mxu0 0.0
        %241 = vmatpush1.msra.mxu0 0.0
        %242 = vmatprep.subr.mxu0 0.0
        %243 = vmatpush1.msra.mxu0 0.0
        %244 = vmatprep.subr.mxu0 0.0
        %245 = vmatpush1.msra.mxu0 0.0
        %246 = vmatprep.subr.mxu0 0.0
        %v247 = vand.u32 %v205, 4294901760
        %248 = vmatpush1.msra.mxu0 %v247
        %249 = vmatprep.subr.mxu0 0.0
        %250 = vmatpush2.msra.mxu0 0.0
        %251 = vmatprep.subr.mxu0 0.0
        %252 = vmatpush2.msra.mxu0 0.0
        %253 = vmatprep.subr.mxu0 0.0
        %254 = vmatpush2.msra.mxu0 0.0
        %255 = vmatprep.subr.mxu0 0.0
        %256 = vmatpush2.msra.mxu0 0.0
        %257 = vmatprep.subr.mxu0 0.0
        %258 = vmatpush2.msra.mxu0 0.0
        %259 = vmatprep.subr.mxu0 0.0
        %260 = vmatpush2.msra.mxu0 0.0
        %261 = vmatprep.subr.mxu0 0.0
        %262 = vmatpush2.msra.mxu0 0.0
        %263 = vmatprep.subr.mxu0 0.0
        %264 = vmatpush2.msra.mxu0 0.0
        %265 = vmatprep.subr.mxu0 0.0
        %266 = vmatpush2.msra.mxu0 0.0
        %267 = vmatprep.subr.mxu0 0.0
        %268 = vmatpush2.msra.mxu0 0.0
        %269 = vmatprep.subr.mxu0 0.0
        %270 = vmatpush2.msra.mxu0 0.0
        %271 = vmatprep.subr.mxu0 0.0
        %272 = vmatpush2.msra.mxu0 0.0
        %273 = vmatprep.subr.mxu0 0.0
        %274 = vmatpush2.msra.mxu0 0.0
        %275 = vmatprep.subr.mxu0 0.0
        %276 = vmatpush2.msra.mxu0 0.0
        %277 = vmatprep.subr.mxu0 0.0
        %278 = vmatpush2.msra.mxu0 0.0
        %279 = vmatprep.subr.mxu0 0.0
        %280 = vmatpush2.msra.mxu0 0.0
        %281 = vmatprep.mubr.f32.mxu0 0.0
        %v282 = vand.u32 %v214, 4294901760
        %v283 = vsub.f32 %v214, %v282
        %v284 = vand.u32 %v283, 4294901760
        %v285 = vsub.f32 %v283, %v284
        %v286 = vand.u32 %v285, 4294901760
        %287 = vmatmul.mubr.f32.gmra.mxu0 %v286
        %v288 = vpop.f32.mrf.mxu0
        %v289 = vadd.f32 %v210, %v288
        %v290 = vpop.f32.mrf.mxu0
        %291 = vdwg.mxu0
        %292 = vmatprep.subr.mxu0 0.0
        %293 = vmatpush1.msra.mxu0 0.0
        %294 = vmatprep.subr.mxu0 0.0
        %295 = vmatpush1.msra.mxu0 0.0
        %296 = vmatprep.subr.mxu0 0.0
        %297 = vmatpush1.msra.mxu0 0.0
        %298 = vmatprep.subr.mxu0 0.0
        %299 = vmatpush1.msra.mxu0 0.0
        %300 = vmatprep.subr.mxu0 0.0
        %301 = vmatpush1.msra.mxu0 0.0
        %302 = vmatprep.subr.mxu0 0.0
        %303 = vmatpush1.msra.mxu0 0.0
        %304 = vmatprep.subr.mxu0 0.0
        %305 = vmatpush1.msra.mxu0 0.0
        %306 = vmatprep.subr.mxu0 0.0
        %307 = vmatpush1.msra.mxu0 0.0
        %308 = vmatprep.subr.mxu0 0.0
        %309 = vmatpush1.msra.mxu0 0.0
        %310 = vmatprep.subr.mxu0 0.0
        %311 = vmatpush1.msra.mxu0 0.0
        %312 = vmatprep.subr.mxu0 0.0
        %313 = vmatpush1.msra.mxu0 0.0
        %314 = vmatprep.subr.mxu0 0.0
        %315 = vmatpush1.msra.mxu0 0.0
        %316 = vmatprep.subr.mxu0 0.0
        %317 = vmatpush1.msra.mxu0 0.0
        %318 = vmatprep.subr.mxu0 0.0
        %319 = vmatpush1.msra.mxu0 0.0
        %320 = vmatprep.subr.mxu0 0.0
        %321 = vmatpush1.msra.mxu0 0.0
        %322 = vmatprep.subr.mxu0 0.0
        %v323 = vand.u32 %v205, 4294901760
        %v324 = vsub.f32 %v205, %v323
        %v325 = vand.u32 %v324, 4294901760
        %v326 = vsub.f32 %v324, %v325
        %v327 = vand.u32 %v326, 4294901760
        %328 = vmatpush1.msra.mxu0 %v327
        %329 = vmatprep.subr.mxu0 0.0
        %330 = vmatpush2.msra.mxu0 0.0
        %331 = vmatprep.subr.mxu0 0.0
        %332 = vmatpush2.msra.mxu0 0.0
        %333 = vmatprep.subr.mxu0 0.0
        %334 = vmatpush2.msra.mxu0 0.0
        %335 = vmatprep.subr.mxu0 0.0
        %336 = vmatpush2.msra.mxu0 0.0
        %337 = vmatprep.subr.mxu0 0.0
        %338 = vmatpush2.msra.mxu0 0.0
        %339 = vmatprep.subr.mxu0 0.0
        %340 = vmatpush2.msra.mxu0 0.0
        %341 = vmatprep.subr.mxu0 0.0
        %342 = vmatpush2.msra.mxu0 0.0
        %343 = vmatprep.subr.mxu0 0.0
        %344 = vmatpush2.msra.mxu0 0.0
        %345 = vmatprep.subr.mxu0 0.0
        %346 = vmatpush2.msra.mxu0 0.0
        %347 = vmatprep.subr.mxu0 0.0
        %348 = vmatpush2.msra.mxu0 0.0
        %349 = vmatprep.subr.mxu0 0.0
        %350 = vmatpush2.msra.mxu0 0.0
        %351 = vmatprep.subr.mxu0 0.0
        %352 = vmatpush2.msra.mxu0 0.0
        %353 = vmatprep.subr.mxu0 0.0
        %354 = vmatpush2.msra.mxu0 0.0
        %355 = vmatprep.subr.mxu0 0.0
        %356 = vmatpush2.msra.mxu0 0.0
        %357 = vmatprep.subr.mxu0 0.0
        %358 = vmatpush2.msra.mxu0 0.0
        %359 = vmatprep.subr.mxu0 0.0
        %360 = vmatpush2.msra.mxu0 0.0
        %361 = vmatprep.mubr.f32.mxu0 0.0
        %v362 = vand.u32 %v214, 4294901760
        %363 = vmatmul.mubr.f32.gmra.mxu0 %v362
        %v364 = vpop.f32.mrf.mxu0
        %v365 = vadd.f32 %v289, %v364
        %v366 = vpop.f32.mrf.mxu0
        %367 = vdwg.mxu0
        %368 = vmatprep.subr.mxu0 0.0
        %369 = vmatpush1.msra.mxu0 0.0
        %370 = vmatprep.subr.mxu0 0.0
        %371 = vmatpush1.msra.mxu0 0.0
        %372 = vmatprep.subr.mxu0 0.0
        %373 = vmatpush1.msra.mxu0 0.0
        %374 = vmatprep.subr.mxu0 0.0
        %375 = vmatpush1.msra.mxu0 0.0
        %376 = vmatprep.subr.mxu0 0.0
        %377 = vmatpush1.msra.mxu0 0.0
        %378 = vmatprep.subr.mxu0 0.0
        %379 = vmatpush1.msra.mxu0 0.0
        %380 = vmatprep.subr.mxu0 0.0
        %381 = vmatpush1.msra.mxu0 0.0
        %382 = vmatprep.subr.mxu0 0.0
        %383 = vmatpush1.msra.mxu0 0.0
        %384 = vmatprep.subr.mxu0 0.0
        %385 = vmatpush1.msra.mxu0 0.0
        %386 = vmatprep.subr.mxu0 0.0
        %387 = vmatpush1.msra.mxu0 0.0
        %388 = vmatprep.subr.mxu0 0.0
        %389 = vmatpush1.msra.mxu0 0.0
        %390 = vmatprep.subr.mxu0 0.0
        %391 = vmatpush1.msra.mxu0 0.0
        %392 = vmatprep.subr.mxu0 0.0
        %393 = vmatpush1.msra.mxu0 0.0
        %394 = vmatprep.subr.mxu0 0.0
        %395 = vmatpush1.msra.mxu0 0.0
        %396 = vmatprep.subr.mxu0 0.0
        %397 = vmatpush1.msra.mxu0 0.0
        %398 = vmatprep.subr.mxu0 0.0
        %v399 = vand.u32 %v205, 4294901760
        %v400 = vsub.f32 %v205, %v399
        %401 = vmatpush1.msra.mxu0 %v400
        %402 = vmatprep.subr.mxu0 0.0
        %403 = vmatpush2.msra.mxu0 0.0
        %404 = vmatprep.subr.mxu0 0.0
        %405 = vmatpush2.msra.mxu0 0.0
        %406 = vmatprep.subr.mxu0 0.0
        %407 = vmatpush2.msra.mxu0 0.0
        %408 = vmatprep.subr.mxu0 0.0
        %409 = vmatpush2.msra.mxu0 0.0
        %410 = vmatprep.subr.mxu0 0.0
        %411 = vmatpush2.msra.mxu0 0.0
        %412 = vmatprep.subr.mxu0 0.0
        %413 = vmatpush2.msra.mxu0 0.0
        %414 = vmatprep.subr.mxu0 0.0
        %415 = vmatpush2.msra.mxu0 0.0
        %416 = vmatprep.subr.mxu0 0.0
        %417 = vmatpush2.msra.mxu0 0.0
        %418 = vmatprep.subr.mxu0 0.0
        %419 = vmatpush2.msra.mxu0 0.0
        %420 = vmatprep.subr.mxu0 0.0
        %421 = vmatpush2.msra.mxu0 0.0
        %422 = vmatprep.subr.mxu0 0.0
        %423 = vmatpush2.msra.mxu0 0.0
        %424 = vmatprep.subr.mxu0 0.0
        %425 = vmatpush2.msra.mxu0 0.0
        %426 = vmatprep.subr.mxu0 0.0
        %427 = vmatpush2.msra.mxu0 0.0
        %428 = vmatprep.subr.mxu0 0.0
        %429 = vmatpush2.msra.mxu0 0.0
        %430 = vmatprep.subr.mxu0 0.0
        %431 = vmatpush2.msra.mxu0 0.0
        %432 = vmatprep.subr.mxu0 0.0
        %433 = vmatpush2.msra.mxu0 0.0
        %434 = vmatprep.mubr.f32.mxu0 0.0
        %v435 = vand.u32 %v214, 4294901760
        %v436 = vsub.f32 %v214, %v435
        %437 = vmatmul.mubr.f32.gmra.mxu0 %v436
        %v438 = vpop.f32.mrf.mxu0
        %v439 = vadd.f32 %v365, %v438
        %v440 = vpop.f32.mrf.mxu0
        %441 = vdwg.mxu0
        %442 = vmatprep.subr.mxu0 0.0
        %443 = vmatpush1.msra.mxu0 0.0
        %444 = vmatprep.subr.mxu0 0.0
        %445 = vmatpush1.msra.mxu0 0.0
        %446 = vmatprep.subr.mxu0 0.0
        %447 = vmatpush1.msra.mxu0 0.0
        %448 = vmatprep.subr.mxu0 0.0
        %449 = vmatpush1.msra.mxu0 0.0
        %450 = vmatprep.subr.mxu0 0.0
        %451 = vmatpush1.msra.mxu0 0.0
        %452 = vmatprep.subr.mxu0 0.0
        %453 = vmatpush1.msra.mxu0 0.0
        %454 = vmatprep.subr.mxu0 0.0
        %455 = vmatpush1.msra.mxu0 0.0
        %456 = vmatprep.subr.mxu0 0.0
        %457 = vmatpush1.msra.mxu0 0.0
        %458 = vmatprep.subr.mxu0 0.0
        %459 = vmatpush1.msra.mxu0 0.0
        %460 = vmatprep.subr.mxu0 0.0
        %461 = vmatpush1.msra.mxu0 0.0
        %462 = vmatprep.subr.mxu0 0.0
        %463 = vmatpush1.msra.mxu0 0.0
        %464 = vmatprep.subr.mxu0 0.0
        %465 = vmatpush1.msra.mxu0 0.0
        %466 = vmatprep.subr.mxu0 0.0
        %467 = vmatpush1.msra.mxu0 0.0
        %468 = vmatprep.subr.mxu0 0.0
        %469 = vmatpush1.msra.mxu0 0.0
        %470 = vmatprep.subr.mxu0 0.0
        %471 = vmatpush1.msra.mxu0 0.0
        %472 = vmatprep.subr.mxu0 0.0
        %v473 = vand.u32 %v205, 4294901760
        %474 = vmatpush1.msra.mxu0 %v473
        %475 = vmatprep.subr.mxu0 0.0
        %476 = vmatpush2.msra.mxu0 0.0
        %477 = vmatprep.subr.mxu0 0.0
        %478 = vmatpush2.msra.mxu0 0.0
        %479 = vmatprep.subr.mxu0 0.0
        %480 = vmatpush2.msra.mxu0 0.0
        %481 = vmatprep.subr.mxu0 0.0
        %482 = vmatpush2.msra.mxu0 0.0
        %483 = vmatprep.subr.mxu0 0.0
        %484 = vmatpush2.msra.mxu0 0.0
        %485 = vmatprep.subr.mxu0 0.0
        %486 = vmatpush2.msra.mxu0 0.0
        %487 = vmatprep.subr.mxu0 0.0
        %488 = vmatpush2.msra.mxu0 0.0
        %489 = vmatprep.subr.mxu0 0.0
        %490 = vmatpush2.msra.mxu0 0.0
        %491 = vmatprep.subr.mxu0 0.0
        %492 = vmatpush2.msra.mxu0 0.0
        %493 = vmatprep.subr.mxu0 0.0
        %494 = vmatpush2.msra.mxu0 0.0
        %495 = vmatprep.subr.mxu0 0.0
        %496 = vmatpush2.msra.mxu0 0.0
        %497 = vmatprep.subr.mxu0 0.0
        %498 = vmatpush2.msra.mxu0 0.0
        %499 = vmatprep.subr.mxu0 0.0
        %500 = vmatpush2.msra.mxu0 0.0
        %501 = vmatprep.subr.mxu0 0.0
        %502 = vmatpush2.msra.mxu0 0.0
        %503 = vmatprep.subr.mxu0 0.0
        %504 = vmatpush2.msra.mxu0 0.0
        %505 = vmatprep.subr.mxu0 0.0
        %506 = vmatpush2.msra.mxu0 0.0
        %507 = vmatprep.mubr.f32.mxu0 0.0
        %v508 = vand.u32 %v214, 4294901760
        %v509 = vsub.f32 %v214, %v508
        %v510 = vand.u32 %v509, 4294901760
        %511 = vmatmul.mubr.f32.gmra.mxu0 %v510
        %v512 = vpop.f32.mrf.mxu0
        %v513 = vadd.f32 %v439, %v512
        %v514 = vpop.f32.mrf.mxu0
        %515 = vdwg.mxu0
        %516 = vmatprep.subr.mxu0 0.0
        %517 = vmatpush1.msra.mxu0 0.0
        %518 = vmatprep.subr.mxu0 0.0
        %519 = vmatpush1.msra.mxu0 0.0
        %520 = vmatprep.subr.mxu0 0.0
        %521 = vmatpush1.msra.mxu0 0.0
        %522 = vmatprep.subr.mxu0 0.0
        %523 = vmatpush1.msra.mxu0 0.0
        %524 = vmatprep.subr.mxu0 0.0
        %525 = vmatpush1.msra.mxu0 0.0
        %526 = vmatprep.subr.mxu0 0.0
        %527 = vmatpush1.msra.mxu0 0.0
        %528 = vmatprep.subr.mxu0 0.0
        %529 = vmatpush1.msra.mxu0 0.0
        %530 = vmatprep.subr.mxu0 0.0
        %531 = vmatpush1.msra.mxu0 0.0
        %532 = vmatprep.subr.mxu0 0.0
        %533 = vmatpush1.msra.mxu0 0.0
        %534 = vmatprep.subr.mxu0 0.0
        %535 = vmatpush1.msra.mxu0 0.0
        %536 = vmatprep.subr.mxu0 0.0
        %537 = vmatpush1.msra.mxu0 0.0
        %538 = vmatprep.subr.mxu0 0.0
        %539 = vmatpush1.msra.mxu0 0.0
        %540 = vmatprep.subr.mxu0 0.0
        %541 = vmatpush1.msra.mxu0 0.0
        %542 = vmatprep.subr.mxu0 0.0
        %543 = vmatpush1.msra.mxu0 0.0
        %544 = vmatprep.subr.mxu0 0.0
        %545 = vmatpush1.msra.mxu0 0.0
        %546 = vmatprep.subr.mxu0 0.0
        %v547 = vand.u32 %v205, 4294901760
        %v548 = vsub.f32 %v205, %v547
        %v549 = vand.u32 %v548, 4294901760
        %550 = vmatpush1.msra.mxu0 %v549
        %551 = vmatprep.subr.mxu0 0.0
        %552 = vmatpush2.msra.mxu0 0.0
        %553 = vmatprep.subr.mxu0 0.0
        %554 = vmatpush2.msra.mxu0 0.0
        %555 = vmatprep.subr.mxu0 0.0
        %556 = vmatpush2.msra.mxu0 0.0
        %557 = vmatprep.subr.mxu0 0.0
        %558 = vmatpush2.msra.mxu0 0.0
        %559 = vmatprep.subr.mxu0 0.0
        %560 = vmatpush2.msra.mxu0 0.0
        %561 = vmatprep.subr.mxu0 0.0
        %562 = vmatpush2.msra.mxu0 0.0
        %563 = vmatprep.subr.mxu0 0.0
        %564 = vmatpush2.msra.mxu0 0.0
        %565 = vmatprep.subr.mxu0 0.0
        %566 = vmatpush2.msra.mxu0 0.0
        %567 = vmatprep.subr.mxu0 0.0
        %568 = vmatpush2.msra.mxu0 0.0
        %569 = vmatprep.subr.mxu0 0.0
        %570 = vmatpush2.msra.mxu0 0.0
        %571 = vmatprep.subr.mxu0 0.0
        %572 = vmatpush2.msra.mxu0 0.0
        %573 = vmatprep.subr.mxu0 0.0
        %574 = vmatpush2.msra.mxu0 0.0
        %575 = vmatprep.subr.mxu0 0.0
        %576 = vmatpush2.msra.mxu0 0.0
        %577 = vmatprep.subr.mxu0 0.0
        %578 = vmatpush2.msra.mxu0 0.0
        %579 = vmatprep.subr.mxu0 0.0
        %580 = vmatpush2.msra.mxu0 0.0
        %581 = vmatprep.subr.mxu0 0.0
        %582 = vmatpush2.msra.mxu0 0.0
        %583 = vmatprep.mubr.f32.mxu0 0.0
        %v584 = vand.u32 %v214, 4294901760
        %585 = vmatmul.mubr.f32.gmra.mxu0 %v584
        %v586 = vpop.f32.mrf.mxu0
        %v587 = vadd.f32 %v513, %v586
        %v588 = vpop.f32.mrf.mxu0
        %589 = vdwg.mxu0
        %590 = vmatprep.subr.mxu0 0.0
        %591 = vmatpush1.msra.mxu0 0.0
        %592 = vmatprep.subr.mxu0 0.0
        %593 = vmatpush1.msra.mxu0 0.0
        %594 = vmatprep.subr.mxu0 0.0
        %595 = vmatpush1.msra.mxu0 0.0
        %596 = vmatprep.subr.mxu0 0.0
        %597 = vmatpush1.msra.mxu0 0.0
        %598 = vmatprep.subr.mxu0 0.0
        %599 = vmatpush1.msra.mxu0 0.0
        %600 = vmatprep.subr.mxu0 0.0
        %601 = vmatpush1.msra.mxu0 0.0
        %602 = vmatprep.subr.mxu0 0.0
        %603 = vmatpush1.msra.mxu0 0.0
        %604 = vmatprep.subr.mxu0 0.0
        %605 = vmatpush1.msra.mxu0 0.0
        %606 = vmatprep.subr.mxu0 0.0
        %607 = vmatpush1.msra.mxu0 0.0
        %608 = vmatprep.subr.mxu0 0.0
        %609 = vmatpush1.msra.mxu0 0.0
        %610 = vmatprep.subr.mxu0 0.0
        %611 = vmatpush1.msra.mxu0 0.0
        %612 = vmatprep.subr.mxu0 0.0
        %613 = vmatpush1.msra.mxu0 0.0
        %614 = vmatprep.subr.mxu0 0.0
        %615 = vmatpush1.msra.mxu0 0.0
        %616 = vmatprep.subr.mxu0 0.0
        %617 = vmatpush1.msra.mxu0 0.0
        %618 = vmatprep.subr.mxu0 0.0
        %619 = vmatpush1.msra.mxu0 0.0
        %620 = vmatprep.subr.mxu0 0.0
        %v621 = vand.u32 %v205, 4294901760
        %622 = vmatpush1.msra.mxu0 %v621
        %623 = vmatprep.subr.mxu0 0.0
        %624 = vmatpush2.msra.mxu0 0.0
        %625 = vmatprep.subr.mxu0 0.0
        %626 = vmatpush2.msra.mxu0 0.0
        %627 = vmatprep.subr.mxu0 0.0
        %628 = vmatpush2.msra.mxu0 0.0
        %629 = vmatprep.subr.mxu0 0.0
        %630 = vmatpush2.msra.mxu0 0.0
        %631 = vmatprep.subr.mxu0 0.0
        %632 = vmatpush2.msra.mxu0 0.0
        %633 = vmatprep.subr.mxu0 0.0
        %634 = vmatpush2.msra.mxu0 0.0
        %635 = vmatprep.subr.mxu0 0.0
        %636 = vmatpush2.msra.mxu0 0.0
        %637 = vmatprep.subr.mxu0 0.0
        %638 = vmatpush2.msra.mxu0 0.0
        %639 = vmatprep.subr.mxu0 0.0
        %640 = vmatpush2.msra.mxu0 0.0
        %641 = vmatprep.subr.mxu0 0.0
        %642 = vmatpush2.msra.mxu0 0.0
        %643 = vmatprep.subr.mxu0 0.0
        %644 = vmatpush2.msra.mxu0 0.0
        %645 = vmatprep.subr.mxu0 0.0
        %646 = vmatpush2.msra.mxu0 0.0
        %647 = vmatprep.subr.mxu0 0.0
        %648 = vmatpush2.msra.mxu0 0.0
        %649 = vmatprep.subr.mxu0 0.0
        %650 = vmatpush2.msra.mxu0 0.0
        %651 = vmatprep.subr.mxu0 0.0
        %652 = vmatpush2.msra.mxu0 0.0
        %653 = vmatprep.subr.mxu0 0.0
        %654 = vmatpush2.msra.mxu0 0.0
        %655 = vmatprep.mubr.f32.mxu0 0.0
        %v656 = vand.u32 %v214, 4294901760
        %657 = vmatmul.mubr.f32.gmra.mxu0 %v656
        %v658 = vpop.f32.mrf.mxu0
        %v659 = vadd.f32 %v587, %v658
        %v660 = vpop.f32.mrf.mxu0
        %661 = vdwg.mxu0
        %662 = vst [vmem:[%s203] sm:$0xf] %v659
        %s663 = sand.u32 %s112, 1
        %s664 = scalar_lea.sflag [#allocation4], %s663
        %s665 = sand.u32 %s112, 1
        %s666 = smul.addr %s665, 4
        %s667 = scalar_lea.vmem [#allocation5], %s666
        // Predicated region
        $region37: #{tpu_custom_call.1} parent=31 // pred_check
          %p668 = pneg %p122
        $region38: #{tpu_custom_call.1} parent=31 // pred_check_branch
          %670 = sbr.rel (%p668) target = $region40
        $region39: #{tpu_custom_call.1} parent=31 // pred_region
          %s672 = ssub.s32 64, 64
          %673 = vsyncadd %s664, %s672
          %s674 = smul.addr %s24, 2
          %s675 = sadd.s32 %s25, %s674
          %s676 = smul.addr %s675, 64
          %s677 = scalar_lea.hbm %s3, %s676
          %s679 = sshll.u32 %s667, 4
          %s680 = int_to_ptr.vmem [resolvable:$true] %s679
          %682 = dma.vmem_to_hbm [thread:$0]  %s680, 64, %s677, %s664
        $region40: #{tpu_custom_call.1} parent=31 // pred_fallthru
          _
      $region32: #{tpu_custom_call.1} parent=5 // pred_fallthru
        _
      %p683 = scmp.le.s32.totalorder 2, %s15
      // Predicated region
      $region41: #{tpu_custom_call.1} parent=5 // pred_check
        %p684 = pneg %p683
      $region42: #{tpu_custom_call.1} parent=5 // pred_check_branch
        %686 = sbr.rel (%p684) target = $region44
      $region43: #{tpu_custom_call.1} parent=5 // pred_region
        %s687 = ssub.s32 %s15, 2
        // Predicated region
        $region45: #{tpu_custom_call.1} parent=43 // pred_check
          %p688 = pneg %p128
        $region46: #{tpu_custom_call.1} parent=43 // pred_check_branch
          %690 = sbr.rel (%p688) target = $region48
        $region47: #{tpu_custom_call.1} parent=43 // pred_region
          %s691 = sand.u32 %s113, 1
          %s692 = scalar_lea.sflag [#allocation4], %s691
          %s693 = sand.u32 %s113, 1
          %s694 = smul.addr %s693, 4
          %s695 = scalar_lea.vmem [#allocation5], %s694
          %696 = dma.done %s692, 64
        $region48: #{tpu_custom_call.1} parent=43 // pred_fallthru
          _
      $region44: #{tpu_custom_call.1} parent=5 // pred_fallthru
        _
    $region6: #{tpu_custom_call.1} parent=1 // loop_footer
      %s19 = sadd.s32 1, %s15
    $region7: #{tpu_custom_call.1} parent=1 // loop_footer_branch
      %14 = sbr.rel target = $region3
    $region8: #{tpu_custom_call.1} parent=1 // loop_exit
      _
    %697 = vsyncpa [#allocation3], 1
    %s698 = scalar_lea.sflag [#allocation3], 1
    %699 = vsyncpa %s698, 1
    %700 = vsyncpa [#allocation4], 1
    %s701 = scalar_lea.sflag [#allocation4], 1
    %702 = vsyncpa %s701, 1

</llo_original>
